<compile_context>
chip_gen: v7x
topology: tpu7x:2x2x1
jax: 0.10.0
libtpu: 0.0.40
codegen_flags: <defaults>
</compile_context>

<pallas_src>
import math

import jax
import jax.numpy as jnp
from jax.experimental import pallas as pl
from jax.experimental.pallas import tpu as pltpu


def _poly3_kernel(coef_ref, x_ref, o_ref):
    # coef_ref: SMEM (4,) float32 -> [a, b, c, d]   (scalar-prefetched)
    a = coef_ref[0]
    b = coef_ref[1]
    c = coef_ref[2]
    d = coef_ref[3]
    x = x_ref[...]
    # Horner form: a + x*(b + x*(c + x*d))
    o_ref[...] = a + x * (b + x * (c + x * d))


_LANES = 512  # lane-dense last dim (multiple of 128 -> wide unmasked vst)


def _select_tile_rows_and_vmem_limit():
    """Per-generation tile rows (x 512 lanes x 4 B) and optional scoped-VMEM limit."""
    kind = ""
    try:
        kind = jax.devices()[0].device_kind.lower()
    except Exception:  # pragma: no cover - defensive; fall back to safe defaults
        pass
    if "v7" in kind:
        # 8 MiB tile; in+out double-buffered = 32 MiB, exactly the default
        # scoped limit -> raise it (physical VMEM is 64 MiB/TC, leave headroom).
        return 4096, 48 * 1024 * 1024
    if "v6" in kind:
        # 4 MiB tile; 16 MiB footprint fits the 32 MiB default scoped limit.
        return 2048, None
    # v5e / unknown: 2 MiB tile; 8 MiB footprint fits the 16 MiB default limit.
    return 1024, None


def polynomial3(x, a, b, c, d):
    """x: (N, 1) float32 (any N).  Returns (N, 1) float32 = a + b*x + c*x^2 + d*x^3."""
    orig_shape = x.shape
    flat = x.reshape(-1).astype(jnp.float32)   # reshape of contiguous data: free
    total = flat.shape[0]
    coef = jnp.stack([a, b, c, d]).astype(jnp.float32)  # (4,)

    lanes = _LANES
    tile_rows, vmem_limit = _select_tile_rows_and_vmem_limit()

    # Pad only the sub-lane tail (<= 511 elems).  When N is a multiple of 512
    # (typical for large inputs) this is a complete no-op: no pad, no slice.
    rem = total % lanes
    padded = total if rem == 0 else total + (lanes - rem)
    if padded != total:
        flat = jnp.pad(flat, (0, padded - total))
    rows = padded // lanes
    x2d = flat.reshape(rows, lanes)

    # Clamp for small inputs: a full-extent row block is always legal; otherwise
    # tile_rows is a multiple of 8 and the ragged last block is masked by Pallas.
    tile_rows = min(tile_rows, rows)
    grid = (pl.cdiv(rows, tile_rows),)

    cost = pl.CostEstimate(
        flops=6 * padded, transcendentals=0, bytes_accessed=8 * padded
    )

    out2d = pl.pallas_call(
        _poly3_kernel,
        out_shape=jax.ShapeDtypeStruct((rows, lanes), jnp.float32),
        grid_spec=pltpu.PrefetchScalarGridSpec(
            num_scalar_prefetch=1,  # coef -> SMEM, passed to kernel & index_maps
            grid=grid,
            in_specs=[
                pl.BlockSpec((tile_rows, lanes), lambda i, _coef: (i, 0)),
            ],
            out_specs=pl.BlockSpec((tile_rows, lanes), lambda i, _coef: (i, 0)),
        ),
        compiler_params=pltpu.CompilerParams(
            dimension_semantics=("parallel",),   # shards grid steps across TCs (v7x)
            vmem_limit_bytes=vmem_limit,
        ),
        cost_estimate=cost,
    )(coef, x2d)

    if padded != total:
        return out2d.reshape(-1)[:total].reshape(orig_shape)
    return out2d.reshape(orig_shape)


if __name__ == "__main__":
    key = jax.random.PRNGKey(0)
    ka, kb, kc, kd = jax.random.split(key, 4)

    # Deterministic scalar parameters (PyTorch: torch.randn(()) x4).
    a = jax.random.normal(ka, (), dtype=jnp.float32)
    b = jax.random.normal(kb, (), dtype=jnp.float32)
    c = jax.random.normal(kc, (), dtype=jnp.float32)
    d = jax.random.normal(kd, (), dtype=jnp.float32)

    poly = jax.jit(polynomial3)

    # Input consistent with the reference script: linspace(-pi, pi, 4000).reshape(-1, 1)
    N = 4000  # NOT a multiple of 512 -> exercises the tiny-tail-pad path
    x = jnp.linspace(-math.pi, math.pi, N, dtype=jnp.float32).reshape(-1, 1)
    y = jax.block_until_ready(poly(x, a, b, c, d))
    y_ref = a + b * x + c * x**2 + d * x**3
    assert y.shape == (N, 1)
    assert jnp.allclose(y, y_ref, rtol=1e-6, atol=1e-6)

    # Lane-multiple size -> zero-copy path (no pad, no slice) with a ragged row grid.
    N2 = 2048
    x2 = jnp.linspace(-1.0, 1.0, N2, dtype=jnp.float32).reshape(-1, 1)
    y2 = jax.block_until_ready(poly(x2, a, b, c, d))
    y2_ref = a + b * x2 + c * x2**2 + d * x2**3
    assert y2.shape == (N2, 1)
    assert jnp.allclose(y2, y2_ref, rtol=1e-6, atol=1e-6)

    # Very small input (single full-extent block, rows < 8).
    N3 = 300
    x3 = jnp.linspace(-1.0, 1.0, N3, dtype=jnp.float32).reshape(-1, 1)
    y3 = jax.block_until_ready(poly(x3, a, b, c, d))
    y3_ref = a + b * x3 + c * x3**2 + d * x3**3
    assert y3.shape == (N3, 1)
    assert jnp.allclose(y3, y3_ref, rtol=1e-6, atol=1e-6)

    print("KERNEL_OK")
</pallas_src>

<mosaic_0001>
module attributes {stable_mosaic.version = 11 : i64} {
  func.func @_poly3_kernel(%arg0: i32, %arg1: memref<4xf32, #tpu.memory_space<smem>>, %arg2: memref<8x512xf32, #tpu.memory_space<vmem>>, %arg3: memref<8x512xf32, #tpu.memory_space<vmem>>) attributes {dimension_semantics = [#tpu.dimension_semantics<parallel>], iteration_bounds = array<i64: 1>, scalar_prefetch = 1 : i64, scratch_operands = 0 : i64, tpu.core_type = #tpu.core_type<tc>, window_params = [{transform_indices = @transform_0, window_bounds = array<i64: 8, 512>}, {transform_indices = @transform_1, window_bounds = array<i64: 8, 512>}]} {
    %c0 = arith.constant 0 : index
    %0 = memref.load %arg1[%c0] : memref<4xf32, #tpu.memory_space<smem>>
    %c1 = arith.constant 1 : index
    %1 = memref.load %arg1[%c1] : memref<4xf32, #tpu.memory_space<smem>>
    %c2 = arith.constant 2 : index
    %2 = memref.load %arg1[%c2] : memref<4xf32, #tpu.memory_space<smem>>
    %c3 = arith.constant 3 : index
    %3 = memref.load %arg1[%c3] : memref<4xf32, #tpu.memory_space<smem>>
    %c0_0 = arith.constant 0 : index
    %c0_1 = arith.constant 0 : index
    %4 = vector.load %arg2[%c0_0, %c0_1] : memref<8x512xf32, #tpu.memory_space<vmem>>, vector<8x512xf32>
    %5 = vector.broadcast %3 : f32 to vector<8x512xf32>
    %6 = arith.mulf %4, %5 : vector<8x512xf32>
    %7 = vector.broadcast %2 : f32 to vector<8x512xf32>
    %8 = arith.addf %7, %6 : vector<8x512xf32>
    %9 = arith.mulf %4, %8 : vector<8x512xf32>
    %10 = vector.broadcast %1 : f32 to vector<8x512xf32>
    %11 = arith.addf %10, %9 : vector<8x512xf32>
    %12 = arith.mulf %4, %11 : vector<8x512xf32>
    %13 = vector.broadcast %0 : f32 to vector<8x512xf32>
    %14 = arith.addf %13, %12 : vector<8x512xf32>
    %c0_2 = arith.constant 0 : index
    %c0_3 = arith.constant 0 : index
    %15 = vector.load %arg3[%c0_2, %c0_3] : memref<8x512xf32, #tpu.memory_space<vmem>>, vector<8x512xf32>
    tpu.vector_store %arg3[%c0_2, %c0_3], %14 {strides = array<i32>} : memref<8x512xf32, #tpu.memory_space<vmem>>, vector<8x512xf32>,
    return
  }
  func.func @transform_0(%arg0: i32, %arg1: memref<4xf32, #tpu.memory_space<smem>>) -> (i32, i32) {
    %c0_i32 = arith.constant 0 : i32
    %c0_i32_0 = arith.constant 0 : i32
    return %arg0, %c0_i32 : i32, i32
  }
  func.func @transform_1(%arg0: i32, %arg1: memref<4xf32, #tpu.memory_space<smem>>) -> (i32, i32) {
    %c0_i32 = arith.constant 0 : i32
    %c0_i32_0 = arith.constant 0 : i32
    return %arg0, %c0_i32 : i32, i32
  }
}

</mosaic_0001>

<llo_original>
// kernel: polynomial3.1
$region0: #{polynomial3.1}
  #allocation0 [shape = 'u32[]', space=smem, size = 0x4, offset = 0x4, fixed_abs, tag = 'smem constant byte address 0x4 - core index']
  #allocation1 [shape = 'u32[144,128]{1,0:T(1,128)}', space=vmem, size = 0x12000, scoped, tag = 'internal scratch']
  #allocation2 [shape = 's32[1]{0}', space=sflag, size = 0x4, scoped, tag = 'scoped memory for polynomial3.1']
  #allocation3 [shape = 'u8[512]{0}', space=smem, size = 0x200, scoped, tag = 'prefetched SMEM operand 0']
  %s0 = inlined_call_operand.vmem [shape: f32[4], index: 0, kind: input, shape index: {}]
  %s1 = inlined_call_operand.vmem [shape: f32[8,512], index: 1, kind: input, shape index: {}]
  %s2 = inlined_call_operand.vmem [shape: f32[8,512], index: 2, kind: output, shape index: {}]
  %s3 = sld [smem:[#allocation0]]
  $region14: #{polynomial3.1} parent=0
    _
  %s5 = ssub.s32 1, %s3
  %s6 = scalar_select 0, %s5, %s3
  %s7 = sshll.u32 %s0, 4
  %s8 = int_to_ptr.vmem [resolvable:$true] %s7
  %10 = dma.vmem_to_smem %s8, 16, [#allocation3], [#allocation2]
  %11 = dma.done [#allocation2], 16
  %12 = sfence
  // Predicated region
  $region2: #{polynomial3.1} parent=0 // pred_check
    _
  $region3: #{polynomial3.1} parent=0 // pred_check_branch
    %14 = sbr.rel (0) target = $region5
  $region4: #{polynomial3.1} parent=0 // pred_region
    _
  $region5: #{polynomial3.1} parent=0 // pred_fallthru
    _
  %s15 = sld [smem:[#allocation3]]
  %s16 = sld [smem:[#allocation3 + $0x1]]
  %s17 = sld [smem:[#allocation3 + $0x2]]
  %s18 = sld [smem:[#allocation3 + $0x3]]
  %v19 = vld [vmem:[%s1] sm:$0xff]
  %v20 = vld [vmem:[%s1 + $0x8] sm:$0xff]
  %v21 = vld [vmem:[%s1 + $0x10] sm:$0xff]
  %v22 = vld [vmem:[%s1 + $0x18] sm:$0xff]
  %v23 = vstv %s18
  %v24 = vmul.f32 %v19, %v23
  %v25 = vmul.f32 %v20, %v23
  %v26 = vmul.f32 %v21, %v23
  %v27 = vmul.f32 %v22, %v23
  %v28 = vstv %s17
  %v29 = vadd.f32 %v28, %v24
  %v30 = vadd.f32 %v28, %v25
  %v31 = vadd.f32 %v28, %v26
  %v32 = vadd.f32 %v28, %v27
  %v33 = vmul.f32 %v19, %v29
  %v34 = vmul.f32 %v20, %v30
  %v35 = vmul.f32 %v21, %v31
  %v36 = vmul.f32 %v22, %v32
  %v37 = vstv %s16
  %v38 = vadd.f32 %v37, %v33
  %v39 = vadd.f32 %v37, %v34
  %v40 = vadd.f32 %v37, %v35
  %v41 = vadd.f32 %v37, %v36
  %v42 = vmul.f32 %v19, %v38
  %v43 = vmul.f32 %v20, %v39
  %v44 = vmul.f32 %v21, %v40
  %v45 = vmul.f32 %v22, %v41
  %v46 = vstv %s15
  %v47 = vadd.f32 %v46, %v42
  %v48 = vadd.f32 %v46, %v43
  %v49 = vadd.f32 %v46, %v44
  %v50 = vadd.f32 %v46, %v45
  %51 = vst [vmem:[%s2] sm:$0xff] %v47
  %52 = vst [vmem:[%s2 + $0x8] sm:$0xff] %v48
  %53 = vst [vmem:[%s2 + $0x10] sm:$0xff] %v49
  %54 = vst [vmem:[%s2 + $0x18] sm:$0xff] %v50
  // Predicated region
  $region6: #{polynomial3.1} parent=0 // pred_check
    _
  $region7: #{polynomial3.1} parent=0 // pred_check_branch
    %56 = sbr.rel (0) target = $region9
  $region8: #{polynomial3.1} parent=0 // pred_region
    _
  $region9: #{polynomial3.1} parent=0 // pred_fallthru
    _
  // Predicated region
  $region10: #{polynomial3.1} parent=0 // pred_check
    _
  $region11: #{polynomial3.1} parent=0 // pred_check_branch
    %58 = sbr.rel (0) target = $region13
  $region12: #{polynomial3.1} parent=0 // pred_region
    _
  $region13: #{polynomial3.1} parent=0 // pred_fallthru
    _

</llo_original>
